<compile_context>
chip_gen: v5e
topology: v5e:2x2
jax: 0.10.0
libtpu: 0.0.40
codegen_flags: <defaults>
</compile_context>

<pallas_src>
import functools

import jax
import jax.numpy as jnp
from jax import lax
from jax.experimental import pallas as pl
from jax.experimental.pallas import tpu as pltpu


def _conv_bn_act_kernel(x_ref, b_ref, bias_ref, o_ref, *, KH, THO, stride):
    """One (batch, output-row-block) tile per grid step.

    x_ref:    (1, S, Hd, Wp*Cin)    H-phase-decomposed padded image, (W,Cin)
                                    fused into lanes; resident across h blocks.
    b_ref:    (KH, Wp*Cin, WO*Cout) block-Toeplitz BN-folded weights.
    bias_ref: (1, WO*Cout)          folded BN bias tiled over WO (f32).
    o_ref:    (1, THO, WO*Cout)     lane-fused output tile.
    """
    h_blk = pl.program_id(1)
    h0 = pl.multiple_of(h_blk * THO, THO)

    acc = None
    for kh in range(KH):                        # static, KH is tiny (e.g. 3)
        rh, qh = kh % stride, kh // stride      # H phase / in-phase row offset
        slab = x_ref[0, rh, pl.ds(h0 + qh, THO), :]           # (THO, Wp*Cin)
        part = jnp.dot(slab, b_ref[kh], preferred_element_type=jnp.float32)
        acc = part if acc is None else acc + part
    y = jnp.maximum(acc + bias_ref[...], 0.0)   # folded-BN bias + ReLU, f32
    o_ref[0] = y.astype(o_ref.dtype)


def _pick_block_h(HO, target_rows=256):
    """Output rows per grid step (= matmul M dim).

    Whole image if HO <= target; else the largest divisor of HO that is a
    multiple of 8 (the (8,128) block rule) and <= target.  Falls back to HO
    (always legal via the full-array-dim exception)."""
    if HO <= target_rows:
        return HO
    cands = [t for t in range(8, target_rows + 1, 8) if HO % t == 0]
    return max(cands) if cands else HO


def conv_bn_act(x_nchw, weight_oihw, gamma, beta, running_mean, running_var,
                *, stride=1, eps=1e-5, compute_dtype=jnp.bfloat16,
                out_dtype=jnp.float32, block_h=None):
    """Forward pass matching ConvBnAct.forward (BatchNorm in eval mode).

    x_nchw:      (N, Cin, H, W)      float32
    weight_oihw: (Cout, Cin, KH, KW) float32 (conv bias=False)
    returns      (N, Cout, HO, WO)   x_nchw.dtype
    """
    N, Cin, H, W = x_nchw.shape
    Cout, Cin2, KH, KW = weight_oihw.shape
    assert Cin2 == Cin
    s = stride
    pad_h, pad_w = KH // 2, KW // 2          # nn.Conv2d(..., padding=K//2)
    Hp, Wp = H + 2 * pad_h, W + 2 * pad_w
    HO = (Hp - KH) // s + 1
    WO = (Wp - KW) // s + 1

    # --- BN folding (eval mode): y = conv(x, w*scale) + (beta - mean*scale) ---
    scale = gamma / jnp.sqrt(running_var + eps)              # (Cout,)
    w_folded = weight_oihw * scale[:, None, None, None]
    bias = beta - running_mean * scale

    # --- input: NCHW -> NHWC, spatial pad, H-phase decompose, fuse (W,Cin) ---
    x_nhwc = jnp.transpose(x_nchw, (0, 2, 3, 1))
    x_pad = jnp.pad(x_nhwc, ((0, 0), (pad_h, pad_h), (pad_w, pad_w), (0, 0)))
    Hd = HO + (KH - 1) // s                  # rows needed per H phase
    phases = []
    for rh in range(s):
        ph = x_pad[:, rh::s, :, :]
        L = ph.shape[1]
        ph = ph[:, :Hd] if L >= Hd else jnp.pad(
            ph, ((0, 0), (0, Hd - L), (0, 0), (0, 0)))
        phases.append(ph)
    x_ph = jnp.stack(phases, axis=1)                         # (N, S, Hd, Wp, Cin)
    x_ph = x_ph.reshape(N, s, Hd, Wp * Cin).astype(compute_dtype)

    # --- block-Toeplitz weights: B[kh, (wo*s+kw)*Cin+cin, wo*Cout+co] = w ---
    w_t = jnp.transpose(w_folded, (2, 3, 1, 0))              # (KH, KW, Cin, Cout)
    wo_idx = jnp.arange(WO)
    T = jnp.zeros((KH, Wp, Cin, WO, Cout), jnp.float32)
    for kw in range(KW):
        val = jnp.broadcast_to(w_t[:, kw][None], (WO, KH, Cin, Cout))
        T = T.at[:, wo_idx * s + kw, :, wo_idx, :].set(val)
    B = T.reshape(KH, Wp * Cin, WO * Cout).astype(compute_dtype)

    bias_tiled = jnp.tile(bias, WO).reshape(1, WO * Cout).astype(jnp.float32)

    THO = block_h if block_h is not None else _pick_block_h(HO)
    assert HO % THO == 0, (HO, THO)
    HB = HO // THO

    kernel = functools.partial(_conv_bn_act_kernel, KH=KH, THO=THO, stride=s)

    # Explicit VMEM budget (review: v7x default scoped limit is 32 MiB).
    bpe = jnp.dtype(compute_dtype).itemsize
    vmem_est = (2 * s * Hd * Wp * Cin * bpe          # double-buffered input
                + KH * Wp * Cin * WO * Cout * bpe    # resident Toeplitz weights
                + WO * Cout * 4                      # bias
                + 6 * THO * WO * Cout * 4)           # out blocks + acc temps
    vmem_limit = int(min(max(2 * vmem_est, 32 * 2**20), 128 * 2**20))

    out = pl.pallas_call(
        kernel,
        out_shape=jax.ShapeDtypeStruct((N, HO, WO * Cout), out_dtype),
        grid_spec=pltpu.PrefetchScalarGridSpec(
            num_scalar_prefetch=0,
            grid=(N, HB),
            in_specs=[
                # Full per-image block; constant index over h -> one DMA/image.
                pl.BlockSpec((1, s, Hd, Wp * Cin), lambda n, h: (n, 0, 0, 0)),
                pl.BlockSpec((KH, Wp * Cin, WO * Cout), lambda n, h: (0, 0, 0)),
                pl.BlockSpec((1, WO * Cout), lambda n, h: (0, 0)),
            ],
            out_specs=pl.BlockSpec((1, THO, WO * Cout), lambda n, h: (n, h, 0)),
        ),
        compiler_params=pltpu.CompilerParams(
            # Shard the batch axis across cores (not h: h-sharding would make
            # each v7x core DMA + hold its own copy of the resident image).
            dimension_semantics=("parallel", "arbitrary"),
            vmem_limit_bytes=vmem_limit),
    )(x_ph, B, bias_tiled)

    out = out.reshape(N, HO, WO, Cout)
    return jnp.transpose(out, (0, 3, 1, 2)).astype(x_nchw.dtype)   # back to NCHW


def _reference(x_nchw, weight_oihw, gamma, beta, running_mean, running_var,
               *, stride=1, eps=1e-5):
    """Pure-JAX reference (lax conv) for correctness checking."""
    pad = weight_oihw.shape[2] // 2
    y = lax.conv_general_dilated(
        x_nchw, weight_oihw,
        window_strides=(stride, stride),
        padding=((pad, pad), (pad, pad)),
        dimension_numbers=("NCHW", "OIHW", "NCHW"))
    scale = gamma / jnp.sqrt(running_var + eps)
    bias = beta - running_mean * scale
    y = y * scale[None, :, None, None] + bias[None, :, None, None]
    return jnp.maximum(y, 0.0)


if __name__ == "__main__":
    # ConvBnAct(in_chs=4, out_chs=8, kernel_size=3)
    N, Cin, H, W = 2, 4, 16, 16
    Cout, K = 8, 3

    key = jax.random.PRNGKey(0)
    kx, kw, kg, kb, km, kv = jax.random.split(key, 6)

    x = jax.random.normal(kx, (N, Cin, H, W), dtype=jnp.float32)
    weight = jax.random.normal(kw, (Cout, Cin, K, K), dtype=jnp.float32) * 0.1
    gamma = 1.0 + 0.1 * jax.random.normal(kg, (Cout,), dtype=jnp.float32)
    beta = 0.1 * jax.random.normal(kb, (Cout,), dtype=jnp.float32)
    running_mean = 0.1 * jax.random.normal(km, (Cout,), dtype=jnp.float32)
    running_var = jnp.abs(1.0 + 0.1 * jax.random.normal(kv, (Cout,),
                                                        dtype=jnp.float32))

    # 1) stride=1, f32 compute: exact-path check against the f32 reference.
    out = conv_bn_act(x, weight, gamma, beta, running_mean, running_var,
                      stride=1, compute_dtype=jnp.float32)
    out = jax.block_until_ready(out)
    ref = _reference(x, weight, gamma, beta, running_mean, running_var, stride=1)
    assert out.shape == (N, Cout, H, W), out.shape
    assert jnp.allclose(out, ref, atol=1e-4, rtol=1e-4), (
        float(jnp.max(jnp.abs(out - ref))))

    # 2) stride=1, default bf16 compute (fast MXU path): loose tolerance.
    out_bf = conv_bn_act(x, weight, gamma, beta, running_mean, running_var,
                         stride=1)
    out_bf = jax.block_until_ready(out_bf)
    assert jnp.allclose(out_bf, ref, atol=1e-1, rtol=1e-1), (
        float(jnp.max(jnp.abs(out_bf - ref))))

    # 3) stride=2, f32 compute: exercises the H-phase / strided-Toeplitz path.
    out_s2 = conv_bn_act(x, weight, gamma, beta, running_mean, running_var,
                         stride=2, compute_dtype=jnp.float32)
    out_s2 = jax.block_until_ready(out_s2)
    ref_s2 = _reference(x, weight, gamma, beta, running_mean, running_var,
                        stride=2)
    assert out_s2.shape == ref_s2.shape == (N, Cout, H // 2, W // 2)
    assert jnp.allclose(out_s2, ref_s2, atol=1e-4, rtol=1e-4), (
        float(jnp.max(jnp.abs(out_s2 - ref_s2))))

    print("KERNEL_OK")
</pallas_src>

<mosaic_0001>
module attributes {stable_mosaic.version = 11 : i64} {
  func.func @_conv_bn_act_kernel(%arg0: i32, %arg1: i32, %arg2: memref<1x1x18x72xf32, #tpu.memory_space<vmem>>, %arg3: memref<3x72x128xf32, #tpu.memory_space<vmem>>, %arg4: memref<1x128xf32, #tpu.memory_space<vmem>>, %arg5: memref<1x16x128xf32, #tpu.memory_space<vmem>>) attributes {dimension_semantics = [#tpu.dimension_semantics<parallel>, #tpu.dimension_semantics<arbitrary>], iteration_bounds = array<i64: 2, 1>, scalar_prefetch = 0 : i64, scratch_operands = 0 : i64, tpu.core_type = #tpu.core_type<tc>, window_params = [{transform_indices = @transform_0, window_bounds = array<i64: 1, 1, 18, 72>}, {pipeline_mode = #tpu.pipeline_mode<synchronous>, transform_indices = @transform_1, window_bounds = array<i64: 3, 72, 128>}, {pipeline_mode = #tpu.pipeline_mode<synchronous>, transform_indices = @transform_2, window_bounds = array<i64: 1, 128>}, {transform_indices = @transform_3, window_bounds = array<i64: 1, 16, 128>}]} {
    %c16_i32 = arith.constant 16 : i32
    %0 = arith.muli %arg1, %c16_i32 : i32
    %1 = tpu.assume_multiple %0, 16 : i32
    %c0_i32 = arith.constant 0 : i32
    %2 = arith.addi %1, %c0_i32 : i32
    %c0 = arith.constant 0 : index
    %c0_0 = arith.constant 0 : index
    %3 = arith.index_cast %2 : i32 to index
    %c0_1 = arith.constant 0 : index
    %4 = vector.load %arg2[%c0, %c0_0, %3, %c0_1] : memref<1x1x18x72xf32, #tpu.memory_space<vmem>>, vector<1x1x16x72xf32>
    %5 = vector.shape_cast %4 : vector<1x1x16x72xf32> to vector<16x72xf32>
    %c0_2 = arith.constant 0 : index
    %c0_3 = arith.constant 0 : index
    %c0_4 = arith.constant 0 : index
    %6 = vector.load %arg3[%c0_2, %c0_3, %c0_4] : memref<3x72x128xf32, #tpu.memory_space<vmem>>, vector<1x72x128xf32>
    %7 = vector.shape_cast %6 : vector<1x72x128xf32> to vector<72x128xf32>
    %cst = arith.constant dense<0.000000e+00> : vector<16x128xf32>
    %8 = tpu.matmul %5, %7, %cst {dimension_numbers = #tpu.dot_dimension_numbers<[1], [0], [0], [1], [0, 0, 1, 1], [], []>} : vector<16x72xf32>, vector<72x128xf32>, vector<16x128xf32> -> vector<16x128xf32>
    %c1_i32 = arith.constant 1 : i32
    %9 = arith.addi %1, %c1_i32 : i32
    %c0_5 = arith.constant 0 : index
    %c0_6 = arith.constant 0 : index
    %10 = arith.index_cast %9 : i32 to index
    %c0_7 = arith.constant 0 : index
    %11 = vector.load %arg2[%c0_5, %c0_6, %10, %c0_7] : memref<1x1x18x72xf32, #tpu.memory_space<vmem>>, vector<1x1x16x72xf32>
    %12 = vector.shape_cast %11 : vector<1x1x16x72xf32> to vector<16x72xf32>
    %c1 = arith.constant 1 : index
    %c0_8 = arith.constant 0 : index
    %c0_9 = arith.constant 0 : index
    %13 = vector.load %arg3[%c1, %c0_8, %c0_9] : memref<3x72x128xf32, #tpu.memory_space<vmem>>, vector<1x72x128xf32>
    %14 = vector.shape_cast %13 : vector<1x72x128xf32> to vector<72x128xf32>
    %cst_10 = arith.constant dense<0.000000e+00> : vector<16x128xf32>
    %15 = tpu.matmul %12, %14, %cst_10 {dimension_numbers = #tpu.dot_dimension_numbers<[1], [0], [0], [1], [0, 0, 1, 1], [], []>} : vector<16x72xf32>, vector<72x128xf32>, vector<16x128xf32> -> vector<16x128xf32>
    %16 = arith.addf %8, %15 : vector<16x128xf32>
    %c2_i32 = arith.constant 2 : i32
    %17 = arith.addi %1, %c2_i32 : i32
    %c0_11 = arith.constant 0 : index
    %c0_12 = arith.constant 0 : index
    %18 = arith.index_cast %17 : i32 to index
    %c0_13 = arith.constant 0 : index
    %19 = vector.load %arg2[%c0_11, %c0_12, %18, %c0_13] : memref<1x1x18x72xf32, #tpu.memory_space<vmem>>, vector<1x1x16x72xf32>
    %20 = vector.shape_cast %19 : vector<1x1x16x72xf32> to vector<16x72xf32>
    %c2 = arith.constant 2 : index
    %c0_14 = arith.constant 0 : index
    %c0_15 = arith.constant 0 : index
    %21 = vector.load %arg3[%c2, %c0_14, %c0_15] : memref<3x72x128xf32, #tpu.memory_space<vmem>>, vector<1x72x128xf32>
    %22 = vector.shape_cast %21 : vector<1x72x128xf32> to vector<72x128xf32>
    %cst_16 = arith.constant dense<0.000000e+00> : vector<16x128xf32>
    %23 = tpu.matmul %20, %22, %cst_16 {dimension_numbers = #tpu.dot_dimension_numbers<[1], [0], [0], [1], [0, 0, 1, 1], [], []>} : vector<16x72xf32>, vector<72x128xf32>, vector<16x128xf32> -> vector<16x128xf32>
    %24 = arith.addf %16, %23 : vector<16x128xf32>
    %c0_17 = arith.constant 0 : index
    %c0_18 = arith.constant 0 : index
    %25 = vector.load %arg4[%c0_17, %c0_18] : memref<1x128xf32, #tpu.memory_space<vmem>>, vector<1x128xf32>
    %26 = vector.broadcast %25 : vector<1x128xf32> to vector<16x128xf32>
    %27 = arith.addf %24, %26 : vector<16x128xf32>
    %cst_19 = arith.constant 0.000000e+00 : f32
    %28 = vector.broadcast %cst_19 : f32 to vector<16x128xf32>
    %29 = arith.maximumf %27, %28 : vector<16x128xf32>
    %c0_20 = arith.constant 0 : index
    %c0_21 = arith.constant 0 : index
    %c0_22 = arith.constant 0 : index
    %30 = vector.load %arg5[%c0_20, %c0_21, %c0_22] : memref<1x16x128xf32, #tpu.memory_space<vmem>>, vector<1x16x128xf32>
    %31 = vector.shape_cast %30 : vector<1x16x128xf32> to vector<16x128xf32>
    %32 = vector.shape_cast %29 : vector<16x128xf32> to vector<1x16x128xf32>
    tpu.vector_store %arg5[%c0_20, %c0_21, %c0_22], %32 {strides = array<i32>} : memref<1x16x128xf32, #tpu.memory_space<vmem>>, vector<1x16x128xf32>,
    return
  }
  func.func @transform_0(%arg0: i32, %arg1: i32) -> (i32, i32, i32, i32) {
    %c0_i32 = arith.constant 0 : i32
    %c0_i32_0 = arith.constant 0 : i32
    %c0_i32_1 = arith.constant 0 : i32
    %c0_i32_2 = arith.constant 0 : i32
    return %arg0, %c0_i32, %c0_i32_0, %c0_i32_1 : i32, i32, i32, i32
  }
  func.func @transform_1(%arg0: i32, %arg1: i32) -> (i32, i32, i32) {
    %c0_i32 = arith.constant 0 : i32
    %c0_i32_0 = arith.constant 0 : i32
    %c0_i32_1 = arith.constant 0 : i32
    %c0_i32_2 = arith.constant 0 : i32
    return %c0_i32, %c0_i32_0, %c0_i32_1 : i32, i32, i32
  }
  func.func @transform_2(%arg0: i32, %arg1: i32) -> (i32, i32) {
    %c0_i32 = arith.constant 0 : i32
    %c0_i32_0 = arith.constant 0 : i32
    %c0_i32_1 = arith.constant 0 : i32
    return %c0_i32, %c0_i32_0 : i32, i32
  }
  func.func @transform_3(%arg0: i32, %arg1: i32) -> (i32, i32, i32) {
    %c0_i32 = arith.constant 0 : i32
    %c0_i32_0 = arith.constant 0 : i32
    return %arg0, %arg1, %c0_i32 : i32, i32, i32
  }
}

</mosaic_0001>

<llo_original>
// kernel: tpu_custom_call.1
$region0: #{tpu_custom_call.1}
  #allocation0 [shape = 'u32[]', space=smem, size = 0x4, offset = 0x4, fixed_abs, tag = 'smem constant byte address 0x4 - core index']
  #allocation1 [shape = 'u32[72,128]{1,0:T(1,128)}', space=vmem, size = 0x9000, scoped, tag = 'internal scratch']
  %s0 = inlined_call_operand.vmem [shape: f32[2,1,18,72], index: 0, kind: input, shape index: {}]
  %s1 = inlined_call_operand.hbm [shape: f32[3,72,128], index: 1, kind: input, shape index: {}]
  %s2 = inlined_call_operand.vmem [shape: f32[1,128], index: 2, kind: input, shape index: {}]
  %s3 = inlined_call_operand.hbm [shape: f32[2,16,128], index: 3, kind: output, shape index: {}]
  %s4 = sld [smem:[#allocation0]]
  $region49: #{tpu_custom_call.1} parent=0
    _
  %s6 = ssub.s32 1, %s4
  %s7 = scalar_select 0, %s6, %s4
  $region1: #{tpu_custom_call.1} parent=0
    #allocation2 [shape = 'u8[110592]{0}', space=vmem, size = 0x1b000, scoped, tag = 'input window, operand 1, single buffered']
    #allocation3 [shape = 's32[2]{0}', space=sflag, size = 0x8, scoped, tag = 'scoped memory for tpu_custom_call.1']
    #allocation4 [shape = 's32[2]{0}', space=sflag, size = 0x8, scoped, tag = 'scoped memory for tpu_custom_call.1']
    #allocation5 [shape = 'u8[16384]{0}', space=vmem, size = 0x4000, scoped, tag = 'output window, operand 0']
    %8 = vsyncpa [#allocation3], 0
    %9 = vsyncpa [#allocation4], 0
    %s10 = scalar_lea.sflag [#allocation4], 1
    %11 = vsyncpa %s10, 0
    loop: start=0, step=1, limit=4
    $region2: #{tpu_custom_call.1} parent=1 // loop_pre_header
      _
    $region3: #{tpu_custom_call.1} parent=1 // loop_header
      %s13 = sphi 0, %s17
      %p14 = scmp.ge.s32.totalorder %s13, 4
      %s20 = sphi 0, %s32
      %s21 = sphi 0, %s28
      %s22 = sphi 0, %s20
      %s23 = sphi 0, %s21
      %s24 = sphi 0, %s22
      %s25 = sphi 0, %s23
      %s35 = sphi 0, %s37
      %s38 = sphi 0, %s35
      %s39 = sphi 0, %s38
      %s55 = sphi 0, %s39
      %s59 = sphi 0, %s59
      %s61 = sphi 0, %s59
      %s62 = sphi 0, %s61
      %s76 = sphi 0, %s62
      %s80 = sphi 0, %s80
      %s82 = sphi 0, %s80
      %s83 = sphi 0, %s82
      %s97 = sphi 0, %s83
      %s105 = sphi 0, %s107
      %s108 = sphi 0, %s105
      %s109 = sphi 0, %s108
      %s125 = sphi 0, %s109
    $region4: #{tpu_custom_call.1} parent=1 // loop_header_branch
      %16 = sbr.rel (%p14) target = $region8
    $region5: #{tpu_custom_call.1} parent=1 // loop_body
      %s18 = ssub.s32 %s13, 1
      %s19 = ssub.s32 %s13, 2
      %s26 = sadd.s32 1, %s21
      %p27 = scmp.ge.s32.totalorder %s26, 1
      %s28 = scalar_select %p27, 0, %s26
      %s29 = sadd.s32 1, %s20
      %s30 = scalar_select %p27, %s29, %s20
      %p31 = scmp.ge.s32.totalorder %s30, 2
      %s32 = scalar_select %p31, 0, %s30
      %s33 = ssub.s32 %s20, %s32
      %p34 = scmp.eq.s32.totalorder %s33, 0
      %s36 = sadd.s32 %s35, 1
      %s37 = scalar_select %p34, %s35, %s36
      %p40 = pneg %p34
      %p41 = scmp.eq.s32.totalorder %s13, 1
      %p42 = por %p40, %p41
      %p43 = scmp.ne.s32.totalorder %s35, %s38
      %p44 = scmp.eq.s32.totalorder %s13, 0
      %p45 = por %p43, %p44
      %p46 = scmp.ne.s32.totalorder %s35, %s38
      %p47 = scmp.eq.s32.totalorder %s18, 1
      %p48 = por %p46, %p47
      %p49 = scmp.ne.s32.totalorder %s38, %s39
      %p50 = scmp.eq.s32.totalorder %s18, 0
      %p51 = por %p49, %p50
      %p52 = scmp.ne.s32.totalorder %s38, %s39
      %p53 = scmp.eq.s32.totalorder %s19, 1
      %p54 = por %p52, %p53
      %p56 = scmp.ne.s32.totalorder %s39, %s55
      %p57 = scmp.eq.s32.totalorder %s19, 0
      %p58 = por %p56, %p57
      %s60 = sadd.s32 %s59, 1
      %p63 = scmp.eq.s32.totalorder %s13, 1
      %p64 = scmp.ne.s32.totalorder %s59, %s61
      %p65 = scmp.eq.s32.totalorder %s13, 0
      %p66 = por %p64, %p65
      %p67 = scmp.ne.s32.totalorder %s59, %s61
      %p68 = scmp.eq.s32.totalorder %s18, 1
      %p69 = por %p67, %p68
      %p70 = scmp.ne.s32.totalorder %s61, %s62
      %p71 = scmp.eq.s32.totalorder %s18, 0
      %p72 = por %p70, %p71
      %p73 = scmp.ne.s32.totalorder %s61, %s62
      %p74 = scmp.eq.s32.totalorder %s19, 1
      %p75 = por %p73, %p74
      %p77 = scmp.ne.s32.totalorder %s62, %s76
      %p78 = scmp.eq.s32.totalorder %s19, 0
      %p79 = por %p77, %p78
      %s81 = sadd.s32 %s80, 1
      %p84 = scmp.eq.s32.totalorder %s13, 1
      %p85 = scmp.ne.s32.totalorder %s80, %s82
      %p86 = scmp.eq.s32.totalorder %s13, 0
      %p87 = por %p85, %p86
      %p88 = scmp.ne.s32.totalorder %s80, %s82
      %p89 = scmp.eq.s32.totalorder %s18, 1
      %p90 = por %p88, %p89
      %p91 = scmp.ne.s32.totalorder %s82, %s83
      %p92 = scmp.eq.s32.totalorder %s18, 0
      %p93 = por %p91, %p92
      %p94 = scmp.ne.s32.totalorder %s82, %s83
      %p95 = scmp.eq.s32.totalorder %s19, 1
      %p96 = por %p94, %p95
      %p98 = scmp.ne.s32.totalorder %s83, %s97
      %p99 = scmp.eq.s32.totalorder %s19, 0
      %p100 = por %p98, %p99
      %s101 = ssub.s32 %s20, %s32
      %s102 = ssub.s32 %s21, %s28
      %s103 = sor.u32 %s101, %s102
      %p104 = scmp.eq.s32.totalorder %s103, 0
      %s106 = sadd.s32 %s105, 1
      %s107 = scalar_select %p104, %s105, %s106
      %p110 = pneg %p104
      %p111 = scmp.eq.s32.totalorder %s13, 1
      %p112 = por %p110, %p111
      %p113 = scmp.ne.s32.totalorder %s105, %s108
      %p114 = scmp.eq.s32.totalorder %s13, 0
      %p115 = por %p113, %p114
      %p116 = scmp.ne.s32.totalorder %s105, %s108
      %p117 = scmp.eq.s32.totalorder %s18, 1
      %p118 = por %p116, %p117
      %p119 = scmp.ne.s32.totalorder %s108, %s109
      %p120 = scmp.eq.s32.totalorder %s18, 0
      %p121 = por %p119, %p120
      %p122 = scmp.ne.s32.totalorder %s108, %s109
      %p123 = scmp.eq.s32.totalorder %s19, 1
      %p124 = por %p122, %p123
      %p126 = scmp.ne.s32.totalorder %s109, %s125
      %p127 = scmp.eq.s32.totalorder %s19, 0
      %p128 = por %p126, %p127
      %p129 = scmp.le.s32.totalorder 1, %s13
      %p130 = scmp.lt.s32.totalorder %s13, 3
      %p131 = pnand %p129, %p130
      %p132 = pneg %p131
      // Predicated region
      $region9: #{tpu_custom_call.1} parent=5 // pred_check
        _
      $region10: #{tpu_custom_call.1} parent=5 // pred_check_branch
        %134 = sbr.rel (%p131) target = $region12
      $region11: #{tpu_custom_call.1} parent=5 // pred_region
        %s135 = ssub.s32 %s13, 1
        // Predicated region
        $region13: #{tpu_custom_call.1} parent=11 // pred_check
          %p136 = pneg %p72
        $region14: #{tpu_custom_call.1} parent=11 // pred_check_branch
          %138 = sbr.rel (%p136) target = $region16
        $region15: #{tpu_custom_call.1} parent=11 // pred_region
          %140 = vsyncadd [#allocation3], 0
          %s141 = sshll.u32 %s1, 4
          %s142 = int_to_ptr.hbm [resolvable:$true] %s141
          %s143 = sshll.u32 [#allocation2], 4
          %s144 = int_to_ptr.vmem [resolvable:$true] %s143
          %149 = dma.hbm_to_vmem [thread:$0]  %s142, 3456, %s144, [#allocation3], 128, 128, 8
        $region16: #{tpu_custom_call.1} parent=11 // pred_fallthru
          _
        // Predicated region
        $region17: #{tpu_custom_call.1} parent=11 // pred_check
          %p150 = pneg %p93
        $region18: #{tpu_custom_call.1} parent=11 // pred_check_branch
          %152 = sbr.rel (%p150) target = $region20
        $region19: #{tpu_custom_call.1} parent=11 // pred_region
          _
        $region20: #{tpu_custom_call.1} parent=11 // pred_fallthru
          _
      $region12: #{tpu_custom_call.1} parent=5 // pred_fallthru
        _
      %p153 = scmp.lt.s32.totalorder %s13, 2
      // Predicated region
      $region21: #{tpu_custom_call.1} parent=5 // pred_check
        %p154 = pneg %p153
      $region22: #{tpu_custom_call.1} parent=5 // pred_check_branch
        %156 = sbr.rel (%p154) target = $region24
      $region23: #{tpu_custom_call.1} parent=5 // pred_region
        // Predicated region
        $region25: #{tpu_custom_call.1} parent=23 // pred_check
          %p157 = pneg %p45
        $region26: #{tpu_custom_call.1} parent=23 // pred_check_branch
          %159 = sbr.rel (%p157) target = $region28
        $region27: #{tpu_custom_call.1} parent=23 // pred_region
          %p160 = scmp.lt.s32.totalorder %s20, 1
          %s161 = scalar_select %p160, %s20, 1
          %s162 = smul.addr %s161, 3
          %s163 = smul.addr %s162, 8
          %s164 = scalar_lea.vmem %s0, %s163
        $region28: #{tpu_custom_call.1} parent=23 // pred_fallthru
          _
      $region24: #{tpu_custom_call.1} parent=5 // pred_fallthru
        _
      %p165 = scmp.le.s32.totalorder 1, %s13
      %p166 = scmp.lt.s32.totalorder %s13, 3
      %p167 = pnand %p165, %p166
      %p168 = pneg %p167
      // Predicated region
      $region29: #{tpu_custom_call.1} parent=5 // pred_check
        _
      $region30: #{tpu_custom_call.1} parent=5 // pred_check_branch
        %170 = sbr.rel (%p167) target = $region32
      $region31: #{tpu_custom_call.1} parent=5 // pred_region
        %s171 = ssub.s32 %s13, 1
        // Predicated region
        $region33: #{tpu_custom_call.1} parent=31 // pred_check
          %p172 = pneg %p72
        $region34: #{tpu_custom_call.1} parent=31 // pred_check_branch
          %174 = sbr.rel (%p172) target = $region36
        $region35: #{tpu_custom_call.1} parent=31 // pred_region
          %176 = dma.done [#allocation3], 3456
        $region36: #{tpu_custom_call.1} parent=31 // pred_fallthru
          _
        %p177 = scmp.lt.s32.totalorder %s22, 1
        %s178 = scalar_select %p177, %s22, 1
        %s179 = smul.addr %s178, 3
        %s180 = smul.addr %s179, 8
        %s181 = scalar_lea.vmem %s0, %s180
        %p182 = pneg %p51
        %p183 = pneg %p48
        %p184 = pneg %p72
        %p185 = pneg %p69
        %p186 = pneg %p93
        %p187 = pneg %p90
        %p188 = pneg %p121
        %p189 = pneg %p118
        %s190 = sand.u32 %s108, 1
        %s191 = scalar_lea.sflag [#allocation4], %s190
        %s192 = sand.u32 %s108, 1
        %s193 = smul.addr %s192, 16
        %s194 = scalar_lea.vmem [#allocation5], %s193
        %p195 = scmp.lt.s32.totalorder %s22, 1
        %s196 = scalar_select %p195, %s22, 1
        %s197 = smul.addr %s196, 3
        %s198 = smul.addr %s197, 8
        %s199 = scalar_lea.vmem %s0, %s198
        %s200 = smul.u32 2, %s23
        %s201 = smul.u32 %s23, 16
        %s202 = scalar_lea.vmem %s199, %s201
        %v203 = vld [vmem:[%s202] sm:$0xff]
        %v204 = vld [vmem:[%s202 + $0x8] sm:$0xff]
        %v205 = vld [vmem:[#allocation2] sm:$0xff]
        %v206 = vld [vmem:[#allocation2 + $0x8] sm:$0xff]
        %v207 = vld [vmem:[#allocation2 + $0x10] sm:$0xff]
        %v208 = vld [vmem:[#allocation2 + $0x18] sm:$0xff]
        %v209 = vld [vmem:[#allocation2 + $0x20] sm:$0xff]
        %v210 = vld [vmem:[#allocation2 + $0x28] sm:$0xff]
        %v211 = vld [vmem:[#allocation2 + $0x30] sm:$0xff]
        %v212 = vld [vmem:[#allocation2 + $0x38] sm:$0xff]
        %v213 = vld [vmem:[#allocation2 + $0x40] sm:$0xff]
        %s214 = sadd.s32 %s201, 1
        %s215 = scalar_lea.vmem %s199, %s214
        %v216 = vld [vmem:[%s215] sm:$0xff]
        %v217 = vld [vmem:[%s215 + $0x8] sm:$0xff]
        %s218 = scalar_lea.vmem [#allocation2], 72
        %v219 = vld [vmem:[%s218] sm:$0xff]
        %v220 = vld [vmem:[%s218 + $0x8] sm:$0xff]
        %v221 = vld [vmem:[%s218 + $0x10] sm:$0xff]
        %v222 = vld [vmem:[%s218 + $0x18] sm:$0xff]
        %v223 = vld [vmem:[%s218 + $0x20] sm:$0xff]
        %v224 = vld [vmem:[%s218 + $0x28] sm:$0xff]
        %v225 = vld [vmem:[%s218 + $0x30] sm:$0xff]
        %v226 = vld [vmem:[%s218 + $0x38] sm:$0xff]
        %v227 = vld [vmem:[%s218 + $0x40] sm:$0xff]
        %vm228 = vcmask 588800
        %v230 = vsel %vm228, %v216, 0
        %v233 = vsel %vm228, %v217, 0
        %235 = vmatpush.msra.mxu0 0.0
        %236 = vmatpush.msra.mxu0 0.0
        %237 = vmatpush.msra.mxu0 0.0
        %238 = vmatpush.msra.mxu0 0.0
        %239 = vmatpush.msra.mxu0 0.0
        %240 = vmatpush.msra.mxu0 0.0
        %241 = vmatpush.msra.mxu0 0.0
        %242 = vmatpush.msra.mxu0 %v227
        %243 = vmatpush.msra.mxu0 %v226
        %244 = vmatpush.msra.mxu0 %v225
        %245 = vmatpush.msra.mxu0 %v224
        %246 = vmatpush.msra.mxu0 %v223
        %247 = vmatpush.msra.mxu0 %v222
        %248 = vmatpush.msra.mxu0 %v221
        %249 = vmatpush.msra.mxu0 %v220
        %250 = vmatpush.msra.mxu0 %v219
        %251 = vmatmul.f32.gmra.mxu0 %v230
        %v252 = vpop.f32.mrf.mxu0
        %v253 = vadd.f32 0.0, %v252
        %254 = vmatmul.f32.gmra.mxu0 %v233
        %v255 = vpop.f32.mrf.mxu0
        %v256 = vadd.f32 0.0, %v255
        %257 = vdwg.mxu0
        %v259 = vsel %vm228, %v203, 0
        %v262 = vsel %vm228, %v204, 0
        %264 = vmatpush.msra.mxu0 0.0
        %265 = vmatpush.msra.mxu0 0.0
        %266 = vmatpush.msra.mxu0 0.0
        %267 = vmatpush.msra.mxu0 0.0
        %268 = vmatpush.msra.mxu0 0.0
        %269 = vmatpush.msra.mxu0 0.0
        %270 = vmatpush.msra.mxu0 0.0
        %271 = vmatpush.msra.mxu0 %v213
        %272 = vmatpush.msra.mxu0 %v212
        %273 = vmatpush.msra.mxu0 %v211
        %274 = vmatpush.msra.mxu0 %v210
        %275 = vmatpush.msra.mxu0 %v209
        %276 = vmatpush.msra.mxu0 %v208
        %277 = vmatpush.msra.mxu0 %v207
        %278 = vmatpush.msra.mxu0 %v206
        %279 = vmatpush.msra.mxu0 %v205
        %280 = vmatmul.f32.gmra.mxu0 %v259
        %v281 = vpop.f32.mrf.mxu0
        %v282 = vadd.f32 %v253, %v281
        %283 = vmatmul.f32.gmra.mxu0 %v262
        %v284 = vpop.f32.mrf.mxu0
        %v285 = vadd.f32 %v256, %v284
        %286 = vdwg.mxu0
        %s287 = sadd.s32 %s201, 2
        %s288 = scalar_lea.vmem %s199, %s287
        %v289 = vld [vmem:[%s288] sm:$0xff]
        %v290 = vld [vmem:[%s288 + $0x8] sm:$0xff]
        %s291 = scalar_lea.vmem [#allocation2], 144
        %v292 = vld [vmem:[%s291] sm:$0xff]
        %v293 = vld [vmem:[%s291 + $0x8] sm:$0xff]
        %v294 = vld [vmem:[%s291 + $0x10] sm:$0xff]
        %v295 = vld [vmem:[%s291 + $0x18] sm:$0xff]
        %v296 = vld [vmem:[%s291 + $0x20] sm:$0xff]
        %v297 = vld [vmem:[%s291 + $0x28] sm:$0xff]
        %v298 = vld [vmem:[%s291 + $0x30] sm:$0xff]
        %v299 = vld [vmem:[%s291 + $0x38] sm:$0xff]
        %v300 = vld [vmem:[%s291 + $0x40] sm:$0xff]
        %v302 = vsel %vm228, %v289, 0
        %v305 = vsel %vm228, %v290, 0
        %307 = vmatpush.msra.mxu0 0.0
        %308 = vmatpush.msra.mxu0 0.0
        %309 = vmatpush.msra.mxu0 0.0
        %310 = vmatpush.msra.mxu0 0.0
        %311 = vmatpush.msra.mxu0 0.0
        %312 = vmatpush.msra.mxu0 0.0
        %313 = vmatpush.msra.mxu0 0.0
        %314 = vmatpush.msra.mxu0 %v300
        %315 = vmatpush.msra.mxu0 %v299
        %316 = vmatpush.msra.mxu0 %v298
        %317 = vmatpush.msra.mxu0 %v297
        %318 = vmatpush.msra.mxu0 %v296
        %319 = vmatpush.msra.mxu0 %v295
        %320 = vmatpush.msra.mxu0 %v294
        %321 = vmatpush.msra.mxu0 %v293
        %322 = vmatpush.msra.mxu0 %v292
        %323 = vmatmul.f32.gmra.mxu0 %v302
        %v324 = vpop.f32.mrf.mxu0
        %v325 = vadd.f32 0.0, %v324
        %326 = vmatmul.f32.gmra.mxu0 %v305
        %v327 = vpop.f32.mrf.mxu0
        %v328 = vadd.f32 0.0, %v327
        %329 = vdwg.mxu0
        %v330 = vadd.f32 %v282, %v325
        %v331 = vadd.f32 %v285, %v328
        %v332 = vld [vmem:[%s2] sm:$0x1]
        %v334 = vperm.slane %v332, 0
        %v336 = vadd.f32 %v330, %v334
        %v337 = vadd.f32 %v331, %v334
        %v338 = vmax.f32 %v336, 0.0
        %v339 = vmax.f32 %v337, 0.0
        %340 = vst [vmem:[%s194] sm:$0xff] %v338
        %341 = vst [vmem:[%s194 + $0x8] sm:$0xff] %v339
        %s342 = sand.u32 %s108, 1
        %s343 = scalar_lea.sflag [#allocation4], %s342
        %s344 = sand.u32 %s108, 1
        %s345 = smul.addr %s344, 16
        %s346 = scalar_lea.vmem [#allocation5], %s345
        // Predicated region
        $region37: #{tpu_custom_call.1} parent=31 // pred_check
          %p347 = pneg %p118
        $region38: #{tpu_custom_call.1} parent=31 // pred_check_branch
          %349 = sbr.rel (%p347) target = $region40
        $region39: #{tpu_custom_call.1} parent=31 // pred_region
          %s350 = smul.u32 2, %s23
          %352 = vsyncadd %s343, 0
          %s353 = smul.addr %s22, 2
          %s354 = sadd.s32 %s350, %s353
          %s355 = smul.addr %s354, 8
          %s356 = scalar_lea.hbm %s3, %s355
          %s357 = sshll.u32 %s346, 4
          %s358 = int_to_ptr.vmem [resolvable:$true] %s357
          %s359 = sshll.u32 %s356, 4
          %s360 = int_to_ptr.hbm [resolvable:$true] %s359
          %365 = dma.vmem_to_hbm [thread:$0]  %s358, 256, %s360, %s343, 128, 128, 8
        $region40: #{tpu_custom_call.1} parent=31 // pred_fallthru
          _
      $region32: #{tpu_custom_call.1} parent=5 // pred_fallthru
        _
      %p366 = scmp.le.s32.totalorder 2, %s13
      // Predicated region
      $region41: #{tpu_custom_call.1} parent=5 // pred_check
        %p367 = pneg %p366
      $region42: #{tpu_custom_call.1} parent=5 // pred_check_branch
        %369 = sbr.rel (%p367) target = $region44
      $region43: #{tpu_custom_call.1} parent=5 // pred_region
        %s370 = ssub.s32 %s13, 2
        // Predicated region
        $region45: #{tpu_custom_call.1} parent=43 // pred_check
          %p371 = pneg %p124
        $region46: #{tpu_custom_call.1} parent=43 // pred_check_branch
          %373 = sbr.rel (%p371) target = $region48
        $region47: #{tpu_custom_call.1} parent=43 // pred_region
          %s374 = sand.u32 %s109, 1
          %s375 = scalar_lea.sflag [#allocation4], %s374
          %s376 = sand.u32 %s109, 1
          %s377 = smul.addr %s376, 16
          %s378 = scalar_lea.vmem [#allocation5], %s377
          %380 = dma.done %s375, 256
        $region48: #{tpu_custom_call.1} parent=43 // pred_fallthru
          _
      $region44: #{tpu_custom_call.1} parent=5 // pred_fallthru
        _
    $region6: #{tpu_custom_call.1} parent=1 // loop_footer
      %s17 = sadd.s32 1, %s13
    $region7: #{tpu_custom_call.1} parent=1 // loop_footer_branch
      %12 = sbr.rel target = $region3
    $region8: #{tpu_custom_call.1} parent=1 // loop_exit
      _
    %381 = vsyncpa [#allocation3], 1
    %s382 = scalar_lea.sflag [#allocation3], 1
    %383 = vsyncpa %s382, 1
    %384 = vsyncpa [#allocation4], 1
    %s385 = scalar_lea.sflag [#allocation4], 1
    %386 = vsyncpa %s385, 1

</llo_original>
